<compile_context>
chip_gen: v6e
topology: v6e:2x2x1
jax: 0.10.0
libtpu: 0.0.40
codegen_flags: <defaults>
</compile_context>

<pallas_src>
import functools

import jax
import jax.numpy as jnp
from jax import lax
from jax.experimental import pallas as pl
from jax.experimental.pallas import tpu as pltpu


def _critic_kernel(xa_ref, w1a_ref, w23v_ref, b_ref, out_ref):
    f32 = jnp.float32
    H = b_ref.shape[-1] // 2            # bias slab is (3, 2H)

    xa = xa_ref[...]                    # (T, in+act), bf16

    # --- fused layer 1 (state branch + action branch in one matmul) ---
    # [x | a] @ blockdiag(W1, Wa) + [b1 | ba]  ->  (T, 2H)
    h1a = jnp.dot(xa, w1a_ref[...], preferred_element_type=f32) + b_ref[0:1, :]
    h1a = jnp.maximum(h1a, 0.0)

    # --- layer 2: cat((h1, ha)) @ W2 + b2, K = 2H (fills the 256-deep MXU) ---
    w2 = w23v_ref[0:2 * H, :]
    h2 = (jnp.dot(h1a.astype(w2.dtype), w2, preferred_element_type=f32)
          + b_ref[1:2, 0:H])
    h2 = jnp.maximum(h2, 0.0)

    # --- layer 3 ---
    w3 = w23v_ref[2 * H:3 * H, :]
    h3 = (jnp.dot(h2.astype(w3.dtype), w3, preferred_element_type=f32)
          + b_ref[1:2, H:2 * H])
    h3 = jnp.maximum(h3, 0.0)

    # --- V head, transposed orientation: wv16[16, H] x h3[T, H] -> (16, T).
    # Row 0 is the real head (rows 1..15 are zero padding).  The (1, T) row
    # result is lane-dense, so the output store is a full-lane unmasked vst.
    wv16 = w23v_ref[3 * H:3 * H + 16, :]
    v16 = lax.dot_general(wv16, h3.astype(wv16.dtype),
                          dimension_numbers=(((1,), (1,)), ((), ())),
                          preferred_element_type=f32)
    v_row = v16[0:1, :] + b_ref[2:3, 0:1]          # (1, T) + scalar V bias
    out_ref[...] = v_row.reshape(out_ref.shape).astype(out_ref.dtype)


@functools.partial(jax.jit, static_argnames=("batch_tile",))
def critic_forward(inputs, actions, params, batch_tile=None):
    """Pallas forward of Critic_: returns V of shape [batch, 1] (float32)."""
    B, in_dim = inputs.shape
    _, act_dim = actions.shape
    K = in_dim + act_dim

    # --- batch tile: >=4 grid steps when B allows (2 tiles/TC on v7x),
    # tiles up to 1024 rows for large B (amortize per-step overhead on
    # single-TC v5e/v6e), always a multiple of 8 sublanes. ---
    if batch_tile is None:
        batch_tile = (B + 3) // 4
    batch_tile = max(8, min(1024, ((int(batch_tile) + 7) // 8) * 8))

    num_tiles = pl.cdiv(B, batch_tile)
    B_pad = num_tiles * batch_tile

    # --- build the fused, padded, bf16 [B_pad, in+act] input in one pass
    # (no full-array jnp.pad of inputs/actions). ---
    xa = jnp.zeros((B_pad, K), jnp.bfloat16)
    xa = lax.dynamic_update_slice(xa, inputs.astype(jnp.bfloat16), (0, 0))
    xa = lax.dynamic_update_slice(xa, actions.astype(jnp.bfloat16), (0, in_dim))

    w1a = params["w1a"]        # (in+act, 2H)   bf16, block-diagonal
    w23v = params["w23v"]      # (3H+16, H)     bf16, [W2; W3; V-head(16 rows)]
    biases = params["biases"]  # (3, 2H)        f32,  [b1|ba ; b2|b3 ; bv,0...]

    # Real footprint is a few MiB; keep the scoped limit tight (helps v5e).
    vmem_limit = (8 if batch_tile <= 512 else 16) * 1024 * 1024

    out = pl.pallas_call(
        _critic_kernel,
        # Lane-dense output: one (1, 1, batch_tile) row of V values per tile.
        out_shape=jax.ShapeDtypeStruct((num_tiles, 1, batch_tile), jnp.float32),
        grid_spec=pltpu.PrefetchScalarGridSpec(
            num_scalar_prefetch=0,
            grid=(num_tiles,),
            in_specs=[
                pl.BlockSpec((batch_tile, K), lambda i: (i, 0)),
                pl.BlockSpec(w1a.shape, lambda i: (0, 0)),
                pl.BlockSpec(w23v.shape, lambda i: (0, 0)),
                pl.BlockSpec(biases.shape, lambda i: (0, 0)),
            ],
            out_specs=pl.BlockSpec((1, 1, batch_tile), lambda i: (i, 0, 0)),
        ),
        compiler_params=pltpu.CompilerParams(
            dimension_semantics=("parallel",),
            vmem_limit_bytes=vmem_limit),
    )(xa, w1a, w23v, biases)

    # (num_tiles, 1, batch_tile) flattens in padded-batch order -> (B, 1).
    return out.reshape(B_pad, 1)[:B]


def pack_params(raw, input_dim, action_dim, H, compute_dtype=jnp.bfloat16):
    """Pack unpacked f32 weights into the 3 slabs the kernel consumes."""
    # Block-diagonal fused layer-1 weight: [x | a] @ W1a == [x@W1 | a@Wa].
    w1a = jnp.zeros((input_dim + action_dim, 2 * H), jnp.float32)
    w1a = w1a.at[:input_dim, :H].set(raw["w1"])
    w1a = w1a.at[input_dim:, H:].set(raw["wa"])

    # W2 (2H,H), W3 (H,H) and a 16-row-padded V head stacked into one slab.
    wv16 = jnp.concatenate(
        [raw["wv"].T, jnp.zeros((15, H), jnp.float32)], axis=0)       # (16, H)
    w23v = jnp.concatenate([raw["w2"], raw["w3"], wv16], axis=0)      # (3H+16, H)

    # Bias slab (f32): row0 = [b1|ba], row1 = [b2|b3], row2[0] = bv.
    b_row0 = jnp.concatenate([raw["b1"], raw["ba"]], axis=1)
    b_row1 = jnp.concatenate([raw["b2"], raw["b3"]], axis=1)
    b_row2 = jnp.zeros((1, 2 * H), jnp.float32).at[0, 0].set(raw["bv"][0, 0])
    biases = jnp.concatenate([b_row0, b_row1, b_row2], axis=0)        # (3, 2H)

    return {
        "w1a": w1a.astype(compute_dtype),
        "w23v": w23v.astype(compute_dtype),
        "biases": biases,  # kept in f32: bias add / ReLU stay f32 (v5e-safe)
    }


def init_params(key, input_dim, action_dim, hidden_dim=128):
    """Deterministic init.  Returns (raw f32 params, packed kernel params)."""
    ks = jax.random.split(key, 10)
    scale = 0.1
    H = hidden_dim

    def w(k, shape):
        return (scale * jax.random.normal(k, shape)).astype(jnp.float32)

    # Pre-transposed [in, out] layout (y = x @ W + b), matching nn.Linear.
    raw = {
        "w1": w(ks[0], (input_dim, H)),
        "b1": w(ks[1], (1, H)),
        "wa": w(ks[2], (action_dim, H)),
        "ba": w(ks[3], (1, H)),
        "w2": w(ks[4], (2 * H, H)),   # rows 0..H-1: x half, rows H..2H-1: a half
        "b2": w(ks[5], (1, H)),
        "w3": w(ks[6], (H, H)),
        "b3": w(ks[7], (1, H)),
        "wv": w(ks[8], (H, 1)),
        "bv": w(ks[9], (1, 1)),
    }
    return raw, pack_params(raw, input_dim, action_dim, H)


def reference_forward(inputs, actions, raw, matmul_dtype=jnp.float32):
    """Pure-JAX reference matching the PyTorch forward.

    matmul_dtype=bfloat16 emulates the kernel's numerics (bf16 MXU operands,
    f32 accumulation, f32 bias/ReLU); float32 is the exact PyTorch math.
    """
    f32 = jnp.float32
    relu = lambda t: jnp.maximum(t, 0.0)
    dot = lambda a, b: jnp.dot(a.astype(matmul_dtype), b.astype(matmul_dtype),
                               preferred_element_type=f32)
    x = relu(dot(inputs, raw["w1"]) + raw["b1"])
    a = relu(dot(actions, raw["wa"]) + raw["ba"])
    xa = jnp.concatenate([x, a], axis=1)
    h2 = relu(dot(xa, raw["w2"]) + raw["b2"])
    h3 = relu(dot(h2, raw["w3"]) + raw["b3"])
    return dot(h3, raw["wv"]) + raw["bv"]


if __name__ == "__main__":
    key = jax.random.PRNGKey(0)
    k_in, k_act, k_par = jax.random.split(key, 3)

    batch = 500           # ragged batch: exercises the padded final tile
    input_dim = 16
    action_dim = 2
    hidden_dim = 128      # module default; keeps every matmul lane-native

    inputs = jax.random.normal(k_in, (batch, input_dim), dtype=jnp.float32)
    actions = jax.random.uniform(k_act, (batch, action_dim),
                                 dtype=jnp.float32, minval=-1.0, maxval=1.0)
    raw, packed = init_params(k_par, input_dim, action_dim, hidden_dim)

    # Default tile -> 128 rows, grid=(4,): pipelined DMAs + both v7x cores.
    v = critic_forward(inputs, actions, packed)
    v = jax.block_until_ready(v)
    assert v.shape == (batch, 1)

    # Tight check vs. a reference that uses the same bf16-matmul numerics.
    v_bf16 = reference_forward(inputs, actions, raw, matmul_dtype=jnp.bfloat16)
    err_bf16 = float(jnp.max(jnp.abs(v - v_bf16)))
    assert jnp.allclose(v, v_bf16, atol=1e-3, rtol=1e-3), (
        f"bf16-ref max abs err {err_bf16}")

    # Loose sanity check vs. the exact f32 PyTorch-equivalent forward
    # (tolerance relaxed because matmul operands are bf16, per review).
    v_f32 = reference_forward(inputs, actions, raw, matmul_dtype=jnp.float32)
    err_f32 = float(jnp.max(jnp.abs(v - v_f32)))
    assert jnp.allclose(v, v_f32, atol=1e-1, rtol=1e-1), (
        f"f32-ref max abs err {err_f32}")

    print("KERNEL_OK")
</pallas_src>

<mosaic_0001>
module attributes {stable_mosaic.version = 11 : i64} {
  func.func @_critic_kernel(%arg0: i32, %arg1: memref<128x18xbf16, #tpu.memory_space<vmem>>, %arg2: memref<18x256xbf16, #tpu.memory_space<vmem>>, %arg3: memref<400x128xbf16, #tpu.memory_space<vmem>>, %arg4: memref<3x256xf32, #tpu.memory_space<vmem>>, %arg5: memref<1x1x128xf32, #tpu.memory_space<vmem>>) attributes {dimension_semantics = [#tpu.dimension_semantics<parallel>], iteration_bounds = array<i64: 4>, scalar_prefetch = 0 : i64, scratch_operands = 0 : i64, tpu.core_type = #tpu.core_type<tc>, window_params = [{transform_indices = @transform_0, window_bounds = array<i64: 128, 18>}, {pipeline_mode = #tpu.pipeline_mode<synchronous>, transform_indices = @transform_1, window_bounds = array<i64: 18, 256>}, {pipeline_mode = #tpu.pipeline_mode<synchronous>, transform_indices = @transform_2, window_bounds = array<i64: 400, 128>}, {pipeline_mode = #tpu.pipeline_mode<synchronous>, transform_indices = @transform_3, window_bounds = array<i64: 3, 256>}, {transform_indices = @transform_4, window_bounds = array<i64: 1, 1, 128>}]} {
    %c0 = arith.constant 0 : index
    %c0_0 = arith.constant 0 : index
    %0 = vector.load %arg1[%c0, %c0_0] : memref<128x18xbf16, #tpu.memory_space<vmem>>, vector<128x18xbf16>
    %c0_1 = arith.constant 0 : index
    %c0_2 = arith.constant 0 : index
    %1 = vector.load %arg2[%c0_1, %c0_2] : memref<18x256xbf16, #tpu.memory_space<vmem>>, vector<18x256xbf16>
    %cst = arith.constant dense<0.000000e+00> : vector<128x256xf32>
    %2 = tpu.matmul %0, %1, %cst {dimension_numbers = #tpu.dot_dimension_numbers<[1], [0], [0], [1], [0, 0, 1, 1], [], []>} : vector<128x18xbf16>, vector<18x256xbf16>, vector<128x256xf32> -> vector<128x256xf32>
    %c0_3 = arith.constant 0 : index
    %c0_4 = arith.constant 0 : index
    %3 = vector.load %arg4[%c0_3, %c0_4] : memref<3x256xf32, #tpu.memory_space<vmem>>, vector<1x256xf32>
    %4 = vector.broadcast %3 : vector<1x256xf32> to vector<128x256xf32>
    %5 = arith.addf %2, %4 : vector<128x256xf32>
    %cst_5 = arith.constant 0.000000e+00 : f32
    %6 = vector.broadcast %cst_5 : f32 to vector<128x256xf32>
    %7 = arith.maximumf %5, %6 : vector<128x256xf32>
    %c0_6 = arith.constant 0 : index
    %c0_7 = arith.constant 0 : index
    %8 = vector.load %arg3[%c0_6, %c0_7] : memref<400x128xbf16, #tpu.memory_space<vmem>>, vector<256x128xbf16>
    %9 = arith.truncf %7 : vector<128x256xf32> to vector<128x256xbf16>
    %cst_8 = arith.constant dense<0.000000e+00> : vector<128x128xf32>
    %10 = tpu.matmul %9, %8, %cst_8 {dimension_numbers = #tpu.dot_dimension_numbers<[1], [0], [0], [1], [0, 0, 1, 1], [], []>} : vector<128x256xbf16>, vector<256x128xbf16>, vector<128x128xf32> -> vector<128x128xf32>
    %c1 = arith.constant 1 : index
    %c0_9 = arith.constant 0 : index
    %11 = vector.load %arg4[%c1, %c0_9] : memref<3x256xf32, #tpu.memory_space<vmem>>, vector<1x128xf32>
    %12 = vector.broadcast %11 : vector<1x128xf32> to vector<128x128xf32>
    %13 = arith.addf %10, %12 : vector<128x128xf32>
    %cst_10 = arith.constant 0.000000e+00 : f32
    %14 = vector.broadcast %cst_10 : f32 to vector<128x128xf32>
    %15 = arith.maximumf %13, %14 : vector<128x128xf32>
    %c256 = arith.constant 256 : index
    %c0_11 = arith.constant 0 : index
    %16 = vector.load %arg3[%c256, %c0_11] : memref<400x128xbf16, #tpu.memory_space<vmem>>, vector<128x128xbf16>
    %17 = arith.truncf %15 : vector<128x128xf32> to vector<128x128xbf16>
    %cst_12 = arith.constant dense<0.000000e+00> : vector<128x128xf32>
    %18 = tpu.matmul %17, %16, %cst_12 {dimension_numbers = #tpu.dot_dimension_numbers<[1], [0], [0], [1], [0, 0, 1, 1], [], []>} : vector<128x128xbf16>, vector<128x128xbf16>, vector<128x128xf32> -> vector<128x128xf32>
    %c1_13 = arith.constant 1 : index
    %c128 = arith.constant 128 : index
    %19 = vector.load %arg4[%c1_13, %c128] : memref<3x256xf32, #tpu.memory_space<vmem>>, vector<1x128xf32>
    %20 = vector.broadcast %19 : vector<1x128xf32> to vector<128x128xf32>
    %21 = arith.addf %18, %20 : vector<128x128xf32>
    %cst_14 = arith.constant 0.000000e+00 : f32
    %22 = vector.broadcast %cst_14 : f32 to vector<128x128xf32>
    %23 = arith.maximumf %21, %22 : vector<128x128xf32>
    %c384 = arith.constant 384 : index
    %c0_15 = arith.constant 0 : index
    %24 = vector.load %arg3[%c384, %c0_15] : memref<400x128xbf16, #tpu.memory_space<vmem>>, vector<16x128xbf16>
    %25 = arith.truncf %23 : vector<128x128xf32> to vector<128x128xbf16>
    %cst_16 = arith.constant dense<0.000000e+00> : vector<16x128xf32>
    %26 = tpu.matmul %24, %25, %cst_16 {dimension_numbers = #tpu.dot_dimension_numbers<[1], [1], [0], [0], [0, 0, 1, 0], [], []>} : vector<16x128xbf16>, vector<128x128xbf16>, vector<16x128xf32> -> vector<16x128xf32>
    %27 = vector.extract_strided_slice %26 {offsets = [0, 0], sizes = [1, 128], strides = [1, 1]} : vector<16x128xf32> to vector<1x128xf32>
    %c2 = arith.constant 2 : index
    %c0_17 = arith.constant 0 : index
    %28 = vector.load %arg4[%c2, %c0_17] : memref<3x256xf32, #tpu.memory_space<vmem>>, vector<1x1xf32>
    %29 = vector.broadcast %28 : vector<1x1xf32> to vector<1x128xf32>
    %30 = arith.addf %27, %29 : vector<1x128xf32>
    %31 = vector.shape_cast %30 : vector<1x128xf32> to vector<1x1x128xf32>
    %c0_18 = arith.constant 0 : index
    %c0_19 = arith.constant 0 : index
    %c0_20 = arith.constant 0 : index
    %32 = vector.load %arg5[%c0_18, %c0_19, %c0_20] : memref<1x1x128xf32, #tpu.memory_space<vmem>>, vector<1x1x128xf32>
    tpu.vector_store %arg5[%c0_18, %c0_19, %c0_20], %31 {strides = array<i32>} : memref<1x1x128xf32, #tpu.memory_space<vmem>>, vector<1x1x128xf32>,
    return
  }
  func.func @transform_0(%arg0: i32) -> (i32, i32) {
    %c0_i32 = arith.constant 0 : i32
    %c0_i32_0 = arith.constant 0 : i32
    return %arg0, %c0_i32 : i32, i32
  }
  func.func @transform_1(%arg0: i32) -> (i32, i32) {
    %c0_i32 = arith.constant 0 : i32
    %c0_i32_0 = arith.constant 0 : i32
    %c0_i32_1 = arith.constant 0 : i32
    return %c0_i32, %c0_i32_0 : i32, i32
  }
  func.func @transform_2(%arg0: i32) -> (i32, i32) {
    %c0_i32 = arith.constant 0 : i32
    %c0_i32_0 = arith.constant 0 : i32
    %c0_i32_1 = arith.constant 0 : i32
    return %c0_i32, %c0_i32_0 : i32, i32
  }
  func.func @transform_3(%arg0: i32) -> (i32, i32) {
    %c0_i32 = arith.constant 0 : i32
    %c0_i32_0 = arith.constant 0 : i32
    %c0_i32_1 = arith.constant 0 : i32
    return %c0_i32, %c0_i32_0 : i32, i32
  }
  func.func @transform_4(%arg0: i32) -> (i32, i32, i32) {
    %c0_i32 = arith.constant 0 : i32
    %c0_i32_0 = arith.constant 0 : i32
    %c0_i32_1 = arith.constant 0 : i32
    return %arg0, %c0_i32, %c0_i32_0 : i32, i32, i32
  }
}

</mosaic_0001>

<llo_original>
// kernel: critic_forward.1
$region0: #{critic_forward.1}
  #allocation0 [shape = 'u32[]', space=smem, size = 0x4, offset = 0x4, fixed_abs, tag = 'smem constant byte address 0x4 - core index']
  #allocation1 [shape = 'u32[144,128]{1,0:T(1,128)}', space=vmem, size = 0x12000, scoped, tag = 'internal scratch']
  %s0 = inlined_call_operand.vmem [shape: bf16[512,18], index: 0, kind: input, shape index: {}]
  %s1 = inlined_call_operand.vmem [shape: bf16[18,256], index: 1, kind: input, shape index: {}]
  %s2 = inlined_call_operand.vmem [shape: bf16[400,128], index: 2, kind: input, shape index: {}]
  %s3 = inlined_call_operand.vmem [shape: f32[3,256], index: 3, kind: input, shape index: {}]
  %s4 = inlined_call_operand.hbm [shape: f32[4,1,128], index: 4, kind: output, shape index: {}]
  %s5 = sld [smem:[#allocation0]]
  $region49: #{critic_forward.1} parent=0
    _
  %s7 = ssub.s32 1, %s5
  %s8 = scalar_select 0, %s7, %s5
  $region1: #{critic_forward.1} parent=0
    #allocation2 [shape = 'u8[1024]{0}', space=vmem, size = 0x400, scoped, tag = 'output window, operand 0']
    #allocation3 [shape = 's32[2]{0}', space=sflag, size = 0x8, scoped, tag = 'scoped memory for critic_forward.1']
    %9 = vsyncpa [#allocation3], 0
    %s10 = scalar_lea.sflag [#allocation3], 1
    %11 = vsyncpa %s10, 0
    loop: start=0, step=1, limit=6
    $region2: #{critic_forward.1} parent=1 // loop_pre_header
      _
    $region3: #{critic_forward.1} parent=1 // loop_header
      %s13 = sphi 0, %s17
      %p14 = scmp.ge.s32.totalorder %s13, 6
      %s23 = sphi 0, %s25
      %s26 = sphi 0, %s23
      %s27 = sphi 0, %s26
      %s43 = sphi 0, %s27
      %s47 = sphi 0, %s47
      %s49 = sphi 0, %s47
      %s50 = sphi 0, %s49
      %s64 = sphi 0, %s50
      %s68 = sphi 0, %s68
      %s70 = sphi 0, %s68
      %s71 = sphi 0, %s70
      %s85 = sphi 0, %s71
      %s89 = sphi 0, %s89
      %s91 = sphi 0, %s89
      %s92 = sphi 0, %s91
      %s106 = sphi 0, %s92
      %s112 = sphi 0, %s114
      %s115 = sphi 0, %s112
      %s116 = sphi 0, %s115
      %s132 = sphi 0, %s116
    $region4: #{critic_forward.1} parent=1 // loop_header_branch
      %16 = sbr.rel (%p14) target = $region8
    $region5: #{critic_forward.1} parent=1 // loop_body
      %s18 = ssub.s32 %s13, 1
      %s19 = ssub.s32 %s13, 2
      %s20 = sadd.s32 %s13, 1
      %s21 = ssub.s32 %s13, %s20
      %p22 = scmp.eq.s32.totalorder %s21, 0
      %s24 = sadd.s32 %s23, 1
      %s25 = scalar_select %p22, %s23, %s24
      %p28 = pneg %p22
      %p29 = scmp.eq.s32.totalorder %s13, 3
      %p30 = por %p28, %p29
      %p31 = scmp.ne.s32.totalorder %s23, %s26
      %p32 = scmp.eq.s32.totalorder %s13, 0
      %p33 = por %p31, %p32
      %p34 = scmp.ne.s32.totalorder %s23, %s26
      %p35 = scmp.eq.s32.totalorder %s18, 3
      %p36 = por %p34, %p35
      %p37 = scmp.ne.s32.totalorder %s26, %s27
      %p38 = scmp.eq.s32.totalorder %s18, 0
      %p39 = por %p37, %p38
      %p40 = scmp.ne.s32.totalorder %s26, %s27
      %p41 = scmp.eq.s32.totalorder %s19, 3
      %p42 = por %p40, %p41
      %p44 = scmp.ne.s32.totalorder %s27, %s43
      %p45 = scmp.eq.s32.totalorder %s19, 0
      %p46 = por %p44, %p45
      %s48 = sadd.s32 %s47, 1
      %p51 = scmp.eq.s32.totalorder %s13, 3
      %p52 = scmp.ne.s32.totalorder %s47, %s49
      %p53 = scmp.eq.s32.totalorder %s13, 0
      %p54 = por %p52, %p53
      %p55 = scmp.ne.s32.totalorder %s47, %s49
      %p56 = scmp.eq.s32.totalorder %s18, 3
      %p57 = por %p55, %p56
      %p58 = scmp.ne.s32.totalorder %s49, %s50
      %p59 = scmp.eq.s32.totalorder %s18, 0
      %p60 = por %p58, %p59
      %p61 = scmp.ne.s32.totalorder %s49, %s50
      %p62 = scmp.eq.s32.totalorder %s19, 3
      %p63 = por %p61, %p62
      %p65 = scmp.ne.s32.totalorder %s50, %s64
      %p66 = scmp.eq.s32.totalorder %s19, 0
      %p67 = por %p65, %p66
      %s69 = sadd.s32 %s68, 1
      %p72 = scmp.eq.s32.totalorder %s13, 3
      %p73 = scmp.ne.s32.totalorder %s68, %s70
      %p74 = scmp.eq.s32.totalorder %s13, 0
      %p75 = por %p73, %p74
      %p76 = scmp.ne.s32.totalorder %s68, %s70
      %p77 = scmp.eq.s32.totalorder %s18, 3
      %p78 = por %p76, %p77
      %p79 = scmp.ne.s32.totalorder %s70, %s71
      %p80 = scmp.eq.s32.totalorder %s18, 0
      %p81 = por %p79, %p80
      %p82 = scmp.ne.s32.totalorder %s70, %s71
      %p83 = scmp.eq.s32.totalorder %s19, 3
      %p84 = por %p82, %p83
      %p86 = scmp.ne.s32.totalorder %s71, %s85
      %p87 = scmp.eq.s32.totalorder %s19, 0
      %p88 = por %p86, %p87
      %s90 = sadd.s32 %s89, 1
      %p93 = scmp.eq.s32.totalorder %s13, 3
      %p94 = scmp.ne.s32.totalorder %s89, %s91
      %p95 = scmp.eq.s32.totalorder %s13, 0
      %p96 = por %p94, %p95
      %p97 = scmp.ne.s32.totalorder %s89, %s91
      %p98 = scmp.eq.s32.totalorder %s18, 3
      %p99 = por %p97, %p98
      %p100 = scmp.ne.s32.totalorder %s91, %s92
      %p101 = scmp.eq.s32.totalorder %s18, 0
      %p102 = por %p100, %p101
      %p103 = scmp.ne.s32.totalorder %s91, %s92
      %p104 = scmp.eq.s32.totalorder %s19, 3
      %p105 = por %p103, %p104
      %p107 = scmp.ne.s32.totalorder %s92, %s106
      %p108 = scmp.eq.s32.totalorder %s19, 0
      %p109 = por %p107, %p108
      %s110 = ssub.s32 %s13, %s20
      %p111 = scmp.eq.s32.totalorder %s110, 0
      %s113 = sadd.s32 %s112, 1
      %s114 = scalar_select %p111, %s112, %s113
      %p117 = pneg %p111
      %p118 = scmp.eq.s32.totalorder %s13, 3
      %p119 = por %p117, %p118
      %p120 = scmp.ne.s32.totalorder %s112, %s115
      %p121 = scmp.eq.s32.totalorder %s13, 0
      %p122 = por %p120, %p121
      %p123 = scmp.ne.s32.totalorder %s112, %s115
      %p124 = scmp.eq.s32.totalorder %s18, 3
      %p125 = por %p123, %p124
      %p126 = scmp.ne.s32.totalorder %s115, %s116
      %p127 = scmp.eq.s32.totalorder %s18, 0
      %p128 = por %p126, %p127
      %p129 = scmp.ne.s32.totalorder %s115, %s116
      %p130 = scmp.eq.s32.totalorder %s19, 3
      %p131 = por %p129, %p130
      %p133 = scmp.ne.s32.totalorder %s116, %s132
      %p134 = scmp.eq.s32.totalorder %s19, 0
      %p135 = por %p133, %p134
      %p136 = scmp.le.s32.totalorder 1, %s13
      %p137 = scmp.lt.s32.totalorder %s13, 5
      %p138 = pnand %p136, %p137
      %p139 = pneg %p138
      // Predicated region
      $region9: #{critic_forward.1} parent=5 // pred_check
        _
      $region10: #{critic_forward.1} parent=5 // pred_check_branch
        %141 = sbr.rel (%p138) target = $region12
      $region11: #{critic_forward.1} parent=5 // pred_region
        %s142 = ssub.s32 %s13, 1
        // Predicated region
        $region13: #{critic_forward.1} parent=11 // pred_check
          %p143 = pneg %p60
        $region14: #{critic_forward.1} parent=11 // pred_check_branch
          %145 = sbr.rel (%p143) target = $region16
        $region15: #{critic_forward.1} parent=11 // pred_region
          _
        $region16: #{critic_forward.1} parent=11 // pred_fallthru
          _
        // Predicated region
        $region17: #{critic_forward.1} parent=11 // pred_check
          %p146 = pneg %p81
        $region18: #{critic_forward.1} parent=11 // pred_check_branch
          %148 = sbr.rel (%p146) target = $region20
        $region19: #{critic_forward.1} parent=11 // pred_region
          _
        $region20: #{critic_forward.1} parent=11 // pred_fallthru
          _
        // Predicated region
        $region21: #{critic_forward.1} parent=11 // pred_check
          %p149 = pneg %p102
        $region22: #{critic_forward.1} parent=11 // pred_check_branch
          %151 = sbr.rel (%p149) target = $region24
        $region23: #{critic_forward.1} parent=11 // pred_region
          _
        $region24: #{critic_forward.1} parent=11 // pred_fallthru
          _
      $region12: #{critic_forward.1} parent=5 // pred_fallthru
        _
      %p152 = scmp.lt.s32.totalorder %s13, 4
      // Predicated region
      $region25: #{critic_forward.1} parent=5 // pred_check
        %p153 = pneg %p152
      $region26: #{critic_forward.1} parent=5 // pred_check_branch
        %155 = sbr.rel (%p153) target = $region28
      $region27: #{critic_forward.1} parent=5 // pred_region
        // Predicated region
        $region29: #{critic_forward.1} parent=27 // pred_check
          %p156 = pneg %p33
        $region30: #{critic_forward.1} parent=27 // pred_check_branch
          %158 = sbr.rel (%p156) target = $region32
        $region31: #{critic_forward.1} parent=27 // pred_region
          %s159 = smul.u32 16, %s13
          %p160 = scmp.lt.s32.totalorder %s159, 63
          %s161 = scalar_select %p160, %s159, 63
          %s162 = smul.addr %s161, 4
          %s163 = scalar_lea.vmem %s0, %s162
          %s164 = smul.u32 16, %s13
        $region32: #{critic_forward.1} parent=27 // pred_fallthru
          _
      $region28: #{critic_forward.1} parent=5 // pred_fallthru
        _
      %p165 = scmp.le.s32.totalorder 1, %s13
      %p166 = scmp.lt.s32.totalorder %s13, 5
      %p167 = pnand %p165, %p166
      %p168 = pneg %p167
      // Predicated region
      $region33: #{critic_forward.1} parent=5 // pred_check
        _
      $region34: #{critic_forward.1} parent=5 // pred_check_branch
        %170 = sbr.rel (%p167) target = $region36
      $region35: #{critic_forward.1} parent=5 // pred_region
        %s171 = ssub.s32 %s13, 1
        %s172 = smul.u32 16, %s18
        %p173 = scmp.lt.s32.totalorder %s172, 63
        %s174 = scalar_select %p173, %s172, 63
        %s175 = smul.addr %s174, 4
        %s176 = scalar_lea.vmem %s0, %s175
        %p177 = pneg %p39
        %p178 = pneg %p36
        %p179 = pneg %p60
        %p180 = pneg %p57
        %p181 = pneg %p81
        %p182 = pneg %p78
        %p183 = pneg %p102
        %p184 = pneg %p99
        %p185 = pneg %p128
        %p186 = pneg %p125
        %s187 = sand.u32 %s115, 1
        %s188 = scalar_lea.sflag [#allocation3], %s187
        %s189 = sand.u32 %s115, 1
        %s190 = scalar_lea.vmem [#allocation2], %s189
        %s191 = smul.u32 16, %s18
        %p192 = scmp.lt.s32.totalorder %s191, 63
        %s193 = scalar_select %p192, %s191, 63
        %s194 = smul.addr %s193, 4
        %s195 = scalar_lea.vmem %s0, %s194
        %s196 = smul.u32 16, %s18
        %v198 = vld [vmem:[%s195] sm:$0xf]
        %v199 = vld [vmem:[%s195 + $0x4] sm:$0xf]
        %v200 = vld [vmem:[%s195 + $0x8] sm:$0xf]
        %v201 = vld [vmem:[%s195 + $0xc] sm:$0xf]
        %v202 = vld [vmem:[%s195 + $0x10] sm:$0xf]
        %v203 = vld [vmem:[%s195 + $0x14] sm:$0xf]
        %v204 = vld [vmem:[%s195 + $0x18] sm:$0xf]
        %v205 = vld [vmem:[%s195 + $0x1c] sm:$0xf]
        %v206 = vld [vmem:[%s195 + $0x20] sm:$0xf]
        %v207 = vld [vmem:[%s195 + $0x24] sm:$0xf]
        %v208 = vld [vmem:[%s195 + $0x28] sm:$0xf]
        %v209 = vld [vmem:[%s195 + $0x2c] sm:$0xf]
        %v210 = vld [vmem:[%s195 + $0x30] sm:$0xf]
        %v211 = vld [vmem:[%s195 + $0x34] sm:$0xf]
        %v212 = vld [vmem:[%s195 + $0x38] sm:$0xf]
        %v213 = vld [vmem:[%s195 + $0x3c] sm:$0xf]
        %v214 = vld [vmem:[%s1] sm:$0xff]
        %v215 = vld [vmem:[%s1 + $0x8] sm:$0xff]
        %v216 = vld [vmem:[%s1 + $0x10] sm:$0x11]
        %v217 = vld [vmem:[%s3] ss:$4 sm:$0x3]
        %v219 = vlaneseq
        %v220 = vshrl.u32 %v219, 7
        %v221 = vsub.s32 0, %v220
        %v222 = vrot.slane %v217, %v221
        %v223 = vlaneseq
        %v224 = vshrl.u32 %v223, 7
        %v225 = vsub.s32 1, %v224
        %v226 = vrot.slane %v217, %v225
        %v245 = vunpack.c.l.b16 %v198
        %v246 = vunpack.c.l.b16 %v199
        %v247 = vunpack.c.l.b16 %v200
        %v248 = vunpack.c.l.b16 %v201
        %v249 = vunpack.c.l.b16 %v202
        %v250 = vunpack.c.l.b16 %v203
        %v251 = vunpack.c.l.b16 %v204
        %v252 = vunpack.c.l.b16 %v205
        %v253 = vunpack.c.l.b16 %v206
        %v254 = vunpack.c.l.b16 %v207
        %v255 = vunpack.c.l.b16 %v208
        %v256 = vunpack.c.l.b16 %v209
        %v257 = vunpack.c.l.b16 %v210
        %v258 = vunpack.c.l.b16 %v211
        %v259 = vunpack.c.l.b16 %v212
        %v260 = vunpack.c.l.b16 %v213
        %v261 = vpack.c.b16 %v246, %v245
        %v262 = vpack.c.b16 %v248, %v247
        %v263 = vpack.c.b16 %v250, %v249
        %v264 = vpack.c.b16 %v252, %v251
        %v265 = vpack.c.b16 %v254, %v253
        %v266 = vpack.c.b16 %v256, %v255
        %v267 = vpack.c.b16 %v258, %v257
        %v268 = vpack.c.b16 %v260, %v259
        %v272 = vunpack.c.l.b16 %v214
        %v273 = vunpack.c.h.b16 %v214
        %v274 = vunpack.c.l.b16 %v215
        %v275 = vunpack.c.h.b16 %v215
        %v276 = vunpack.c.l.b16 %v216
        %v277 = vunpack.c.h.b16 %v216
        %v278 = vpack.c.b16 %v274, %v272
        %v279 = vpack.c.b16 %v275, %v273
        %v280 = vpack.c.b16 %v276, %v276
        %v281 = vpack.c.b16 %v277, %v277
        %vm284 = vcmask 146432
        %v286 = vsel %vm284, %v261, 0
        %v289 = vsel %vm284, %v262, 0
        %v292 = vsel %vm284, %v263, 0
        %v295 = vsel %vm284, %v264, 0
        %v298 = vsel %vm284, %v265, 0
        %v301 = vsel %vm284, %v266, 0
        %v304 = vsel %vm284, %v267, 0
        %v307 = vsel %vm284, %v268, 0
        %vm309 = vcmask 1040384
        %v311 = vsel %vm309, %v280, 0
        %v314 = vsel %vm309, %v281, 0
        %316 = vmatprep.subr.bf16.mxu0 0
        %317 = vmatpush1.bf16.msra.mxu0 0
        %318 = vmatprep.subr.bf16.mxu0 0
        %319 = vmatpush1.bf16.msra.mxu0 0
        %320 = vmatprep.subr.bf16.mxu0 0
        %321 = vmatpush1.bf16.msra.mxu0 0
        %322 = vmatprep.subr.bf16.mxu0 0
        %323 = vmatpush1.bf16.msra.mxu0 0
        %324 = vmatprep.subr.bf16.mxu0 0
        %325 = vmatpush1.bf16.msra.mxu0 0
        %326 = vmatprep.subr.bf16.mxu0 0
        %327 = vmatpush1.bf16.msra.mxu0 0
        %328 = vmatprep.subr.bf16.mxu0 %v314
        %329 = vmatpush1.bf16.msra.mxu0 %v311
        %330 = vmatprep.subr.bf16.mxu0 %v279
        %331 = vmatpush1.bf16.msra.mxu0 %v278
        %332 = vmatprep.subr.bf16.mxu0 0
        %333 = vmatpush2.bf16.msra.mxu0 0
        %334 = vmatprep.subr.bf16.mxu0 0
        %335 = vmatpush2.bf16.msra.mxu0 0
        %336 = vmatprep.subr.bf16.mxu0 0
        %337 = vmatpush2.bf16.msra.mxu0 0
        %338 = vmatprep.subr.bf16.mxu0 0
        %339 = vmatpush2.bf16.msra.mxu0 0
        %340 = vmatprep.subr.bf16.mxu0 0
        %341 = vmatpush2.bf16.msra.mxu0 0
        %342 = vmatprep.subr.bf16.mxu0 0
        %343 = vmatpush2.bf16.msra.mxu0 0
        %344 = vmatprep.subr.bf16.mxu0 0
        %345 = vmatpush2.bf16.msra.mxu0 0
        %346 = vmatprep.subr.bf16.mxu0 0
        %347 = vmatpush2.bf16.msra.mxu0 0
        %348 = vmatprep.mubr.bf16.mxu0 0
        %349 = vmatmul.mubr.bf16.gmra.mxu0 %v286
        %v350 = vpop.f32.mrf.mxu0
        %v351 = vadd.f32 %v222, %v350
        %v352 = vpop.f32.mrf.mxu0
        %v353 = vadd.f32 %v226, %v352
        %v354 = vpop.f32.mrf.mxu0
        %v355 = vadd.f32 %v222, %v354
        %v356 = vpop.f32.mrf.mxu0
        %v357 = vadd.f32 %v226, %v356
        %358 = vmatprep.mubr.bf16.mxu0 0
        %359 = vmatmul.mubr.bf16.gmra.mxu0 %v289
        %v360 = vpop.f32.mrf.mxu0
        %v361 = vadd.f32 %v222, %v360
        %v362 = vpop.f32.mrf.mxu0
        %v363 = vadd.f32 %v226, %v362
        %v364 = vpop.f32.mrf.mxu0
        %v365 = vadd.f32 %v222, %v364
        %v366 = vpop.f32.mrf.mxu0
        %v367 = vadd.f32 %v226, %v366
        %368 = vmatprep.mubr.bf16.mxu0 0
        %369 = vmatmul.mubr.bf16.gmra.mxu0 %v292
        %v370 = vpop.f32.mrf.mxu0
        %v371 = vadd.f32 %v222, %v370
        %v372 = vpop.f32.mrf.mxu0
        %v373 = vadd.f32 %v226, %v372
        %v374 = vpop.f32.mrf.mxu0
        %v375 = vadd.f32 %v222, %v374
        %v376 = vpop.f32.mrf.mxu0
        %v377 = vadd.f32 %v226, %v376
        %378 = vmatprep.mubr.bf16.mxu0 0
        %379 = vmatmul.mubr.bf16.gmra.mxu0 %v295
        %v380 = vpop.f32.mrf.mxu0
        %v381 = vadd.f32 %v222, %v380
        %v382 = vpop.f32.mrf.mxu0
        %v383 = vadd.f32 %v226, %v382
        %v384 = vpop.f32.mrf.mxu0
        %v385 = vadd.f32 %v222, %v384
        %v386 = vpop.f32.mrf.mxu0
        %v387 = vadd.f32 %v226, %v386
        %388 = vmatprep.mubr.bf16.mxu0 0
        %389 = vmatmul.mubr.bf16.gmra.mxu0 %v298
        %v390 = vpop.f32.mrf.mxu0
        %v391 = vadd.f32 %v222, %v390
        %v392 = vpop.f32.mrf.mxu0
        %v393 = vadd.f32 %v226, %v392
        %v394 = vpop.f32.mrf.mxu0
        %v395 = vadd.f32 %v222, %v394
        %v396 = vpop.f32.mrf.mxu0
        %v397 = vadd.f32 %v226, %v396
        %398 = vmatprep.mubr.bf16.mxu0 0
        %399 = vmatmul.mubr.bf16.gmra.mxu0 %v301
        %v400 = vpop.f32.mrf.mxu0
        %v401 = vadd.f32 %v222, %v400
        %v402 = vpop.f32.mrf.mxu0
        %v403 = vadd.f32 %v226, %v402
        %v404 = vpop.f32.mrf.mxu0
        %v405 = vadd.f32 %v222, %v404
        %v406 = vpop.f32.mrf.mxu0
        %v407 = vadd.f32 %v226, %v406
        %408 = vmatprep.mubr.bf16.mxu0 0
        %409 = vmatmul.mubr.bf16.gmra.mxu0 %v304
        %v410 = vpop.f32.mrf.mxu0
        %v411 = vadd.f32 %v222, %v410
        %v412 = vpop.f32.mrf.mxu0
        %v413 = vadd.f32 %v226, %v412
        %v414 = vpop.f32.mrf.mxu0
        %v415 = vadd.f32 %v222, %v414
        %v416 = vpop.f32.mrf.mxu0
        %v417 = vadd.f32 %v226, %v416
        %418 = vmatprep.mubr.bf16.mxu0 0
        %419 = vmatmul.mubr.bf16.gmra.mxu0 %v307
        %v420 = vpop.f32.mrf.mxu0
        %v421 = vadd.f32 %v222, %v420
        %v422 = vpop.f32.mrf.mxu0
        %v423 = vadd.f32 %v226, %v422
        %v424 = vpop.f32.mrf.mxu0
        %v425 = vadd.f32 %v222, %v424
        %v426 = vpop.f32.mrf.mxu0
        %v427 = vadd.f32 %v226, %v426
        %428 = vdwg.mxu0
        %v429 = vmax.f32 %v351, 0.0
        %v430 = vmax.f32 %v353, 0.0
        %v431 = vmax.f32 %v355, 0.0
        %v432 = vmax.f32 %v357, 0.0
        %v433 = vmax.f32 %v361, 0.0
        %v434 = vmax.f32 %v363, 0.0
        %v435 = vmax.f32 %v365, 0.0
        %v436 = vmax.f32 %v367, 0.0
        %v437 = vmax.f32 %v371, 0.0
        %v438 = vmax.f32 %v373, 0.0
        %v439 = vmax.f32 %v375, 0.0
        %v440 = vmax.f32 %v377, 0.0
        %v441 = vmax.f32 %v381, 0.0
        %v442 = vmax.f32 %v383, 0.0
        %v443 = vmax.f32 %v385, 0.0
        %v444 = vmax.f32 %v387, 0.0
        %v445 = vmax.f32 %v391, 0.0
        %v446 = vmax.f32 %v393, 0.0
        %v447 = vmax.f32 %v395, 0.0
        %v448 = vmax.f32 %v397, 0.0
        %v449 = vmax.f32 %v401, 0.0
        %v450 = vmax.f32 %v403, 0.0
        %v451 = vmax.f32 %v405, 0.0
        %v452 = vmax.f32 %v407, 0.0
        %v453 = vmax.f32 %v411, 0.0
        %v454 = vmax.f32 %v413, 0.0
        %v455 = vmax.f32 %v415, 0.0
        %v456 = vmax.f32 %v417, 0.0
        %v457 = vmax.f32 %v421, 0.0
        %v458 = vmax.f32 %v423, 0.0
        %v459 = vmax.f32 %v425, 0.0
        %v460 = vmax.f32 %v427, 0.0
        %v461 = vld [vmem:[%s2] sm:$0xf]
        %v462 = vld [vmem:[%s2 + $0x4] sm:$0xf]
        %v463 = vld [vmem:[%s2 + $0x8] sm:$0xf]
        %v464 = vld [vmem:[%s2 + $0xc] sm:$0xf]
        %v465 = vld [vmem:[%s2 + $0x10] sm:$0xf]
        %v466 = vld [vmem:[%s2 + $0x14] sm:$0xf]
        %v467 = vld [vmem:[%s2 + $0x18] sm:$0xf]
        %v468 = vld [vmem:[%s2 + $0x1c] sm:$0xf]
        %v469 = vld [vmem:[%s2 + $0x20] sm:$0xf]
        %v470 = vld [vmem:[%s2 + $0x24] sm:$0xf]
        %v471 = vld [vmem:[%s2 + $0x28] sm:$0xf]
        %v472 = vld [vmem:[%s2 + $0x2c] sm:$0xf]
        %v473 = vld [vmem:[%s2 + $0x30] sm:$0xf]
        %v474 = vld [vmem:[%s2 + $0x34] sm:$0xf]
        %v475 = vld [vmem:[%s2 + $0x38] sm:$0xf]
        %v476 = vld [vmem:[%s2 + $0x3c] sm:$0xf]
        %v477 = vld [vmem:[%s2 + $0x40] sm:$0xf]
        %v478 = vld [vmem:[%s2 + $0x44] sm:$0xf]
        %v479 = vld [vmem:[%s2 + $0x48] sm:$0xf]
        %v480 = vld [vmem:[%s2 + $0x4c] sm:$0xf]
        %v481 = vld [vmem:[%s2 + $0x50] sm:$0xf]
        %v482 = vld [vmem:[%s2 + $0x54] sm:$0xf]
        %v483 = vld [vmem:[%s2 + $0x58] sm:$0xf]
        %v484 = vld [vmem:[%s2 + $0x5c] sm:$0xf]
        %v485 = vld [vmem:[%s2 + $0x60] sm:$0xf]
        %v486 = vld [vmem:[%s2 + $0x64] sm:$0xf]
        %v487 = vld [vmem:[%s2 + $0x68] sm:$0xf]
        %v488 = vld [vmem:[%s2 + $0x6c] sm:$0xf]
        %v489 = vld [vmem:[%s2 + $0x70] sm:$0xf]
        %v490 = vld [vmem:[%s2 + $0x74] sm:$0xf]
        %v491 = vld [vmem:[%s2 + $0x78] sm:$0xf]
        %v492 = vld [vmem:[%s2 + $0x7c] sm:$0xf]
        %v493 = vpack.c.bf16 %v431, %v429
        %v494 = vpack.c.bf16 %v432, %v430
        %v495 = vpack.c.bf16 %v435, %v433
        %v496 = vpack.c.bf16 %v436, %v434
        %v497 = vpack.c.bf16 %v439, %v437
        %v498 = vpack.c.bf16 %v440, %v438
        %v499 = vpack.c.bf16 %v443, %v441
        %v500 = vpack.c.bf16 %v444, %v442
        %v501 = vpack.c.bf16 %v447, %v445
        %v502 = vpack.c.bf16 %v448, %v446
        %v503 = vpack.c.bf16 %v451, %v449
        %v504 = vpack.c.bf16 %v452, %v450
        %v505 = vpack.c.bf16 %v455, %v453
        %v506 = vpack.c.bf16 %v456, %v454
        %v507 = vpack.c.bf16 %v459, %v457
        %v508 = vpack.c.bf16 %v460, %v458
        %v509 = vld [vmem:[%s3 + $0x1] sm:$0x1]
        %v510 = vlaneseq
        %v511 = vshrl.u32 %v510, 7
        %v512 = vsub.s32 0, %v511
        %v513 = vrot.slane %v509, %v512
        %v546 = vunpack.c.l.b16 %v461
        %v547 = vunpack.c.l.b16 %v462
        %v548 = vunpack.c.l.b16 %v463
        %v549 = vunpack.c.l.b16 %v464
        %v550 = vunpack.c.l.b16 %v465
        %v551 = vunpack.c.l.b16 %v466
        %v552 = vunpack.c.l.b16 %v467
        %v553 = vunpack.c.l.b16 %v468
        %v554 = vunpack.c.l.b16 %v469
        %v555 = vunpack.c.l.b16 %v470
        %v556 = vunpack.c.l.b16 %v471
        %v557 = vunpack.c.l.b16 %v472
        %v558 = vunpack.c.l.b16 %v473
        %v559 = vunpack.c.l.b16 %v474
        %v560 = vunpack.c.l.b16 %v475
        %v561 = vunpack.c.l.b16 %v476
        %v562 = vunpack.c.l.b16 %v477
        %v563 = vunpack.c.l.b16 %v478
        %v564 = vunpack.c.l.b16 %v479
        %v565 = vunpack.c.l.b16 %v480
        %v566 = vunpack.c.l.b16 %v481
        %v567 = vunpack.c.l.b16 %v482
        %v568 = vunpack.c.l.b16 %v483
        %v569 = vunpack.c.l.b16 %v484
        %v570 = vunpack.c.l.b16 %v485
        %v571 = vunpack.c.l.b16 %v486
        %v572 = vunpack.c.l.b16 %v487
        %v573 = vunpack.c.l.b16 %v488
        %v574 = vunpack.c.l.b16 %v489
        %v575 = vunpack.c.l.b16 %v490
        %v576 = vunpack.c.l.b16 %v491
        %v577 = vunpack.c.l.b16 %v492
        %v578 = vpack.c.b16 %v547, %v546
        %v579 = vpack.c.b16 %v549, %v548
        %v580 = vpack.c.b16 %v551, %v550
        %v581 = vpack.c.b16 %v553, %v552
        %v582 = vpack.c.b16 %v555, %v554
        %v583 = vpack.c.b16 %v557, %v556
        %v584 = vpack.c.b16 %v559, %v558
        %v585 = vpack.c.b16 %v561, %v560
        %v586 = vpack.c.b16 %v563, %v562
        %v587 = vpack.c.b16 %v565, %v564
        %v588 = vpack.c.b16 %v567, %v566
        %v589 = vpack.c.b16 %v569, %v568
        %v590 = vpack.c.b16 %v571, %v570
        %v591 = vpack.c.b16 %v573, %v572
        %v592 = vpack.c.b16 %v575, %v574
        %v593 = vpack.c.b16 %v577, %v576
        %610 = vmatprep.subr.bf16.mxu0 0
        %611 = vmatpush1.bf16.msra.mxu0 %v585
        %612 = vmatprep.subr.bf16.mxu0 0
        %613 = vmatpush1.bf16.msra.mxu0 %v584
        %614 = vmatprep.subr.bf16.mxu0 0
        %615 = vmatpush1.bf16.msra.mxu0 %v583
        %616 = vmatprep.subr.bf16.mxu0 0
        %617 = vmatpush1.bf16.msra.mxu0 %v582
        %618 = vmatprep.subr.bf16.mxu0 0
        %619 = vmatpush1.bf16.msra.mxu0 %v581
        %620 = vmatprep.subr.bf16.mxu0 0
        %621 = vmatpush1.bf16.msra.mxu0 %v580
        %622 = vmatprep.subr.bf16.mxu0 0
        %623 = vmatpush1.bf16.msra.mxu0 %v579
        %624 = vmatprep.subr.bf16.mxu0 0
        %625 = vmatpush1.bf16.msra.mxu0 %v578
        %626 = vmatprep.subr.bf16.mxu0 0
        %627 = vmatpush2.bf16.msra.mxu0 %v593
        %628 = vmatprep.subr.bf16.mxu0 0
        %629 = vmatpush2.bf16.msra.mxu0 %v592
        %630 = vmatprep.subr.bf16.mxu0 0
        %631 = vmatpush2.bf16.msra.mxu0 %v591
        %632 = vmatprep.subr.bf16.mxu0 0
        %633 = vmatpush2.bf16.msra.mxu0 %v590
        %634 = vmatprep.subr.bf16.mxu0 0
        %635 = vmatpush2.bf16.msra.mxu0 %v589
        %636 = vmatprep.subr.bf16.mxu0 0
        %637 = vmatpush2.bf16.msra.mxu0 %v588
        %638 = vmatprep.subr.bf16.mxu0 0
        %639 = vmatpush2.bf16.msra.mxu0 %v587
        %640 = vmatprep.subr.bf16.mxu0 0
        %641 = vmatpush2.bf16.msra.mxu0 %v586
        %642 = vmatprep.mubr.bf16.mxu0 %v494
        %643 = vmatmul.mubr.bf16.gmra.mxu0 %v493
        %v644 = vpop.f32.mrf.mxu0
        %v645 = vadd.f32 %v513, %v644
        %v646 = vpop.f32.mrf.mxu0
        %v647 = vpop.f32.mrf.mxu0
        %v648 = vadd.f32 %v513, %v647
        %v649 = vpop.f32.mrf.mxu0
        %650 = vmatprep.mubr.bf16.mxu0 %v496
        %651 = vmatmul.mubr.bf16.gmra.mxu0 %v495
        %v652 = vpop.f32.mrf.mxu0
        %v653 = vadd.f32 %v513, %v652
        %v654 = vpop.f32.mrf.mxu0
        %v655 = vpop.f32.mrf.mxu0
        %v656 = vadd.f32 %v513, %v655
        %v657 = vpop.f32.mrf.mxu0
        %658 = vmatprep.mubr.bf16.mxu0 %v498
        %659 = vmatmul.mubr.bf16.gmra.mxu0 %v497
        %v660 = vpop.f32.mrf.mxu0
        %v661 = vadd.f32 %v513, %v660
        %v662 = vpop.f32.mrf.mxu0
        %v663 = vpop.f32.mrf.mxu0
        %v664 = vadd.f32 %v513, %v663
        %v665 = vpop.f32.mrf.mxu0
        %666 = vmatprep.mubr.bf16.mxu0 %v500
        %667 = vmatmul.mubr.bf16.gmra.mxu0 %v499
        %v668 = vpop.f32.mrf.mxu0
        %v669 = vadd.f32 %v513, %v668
        %v670 = vpop.f32.mrf.mxu0
        %v671 = vpop.f32.mrf.mxu0
        %v672 = vadd.f32 %v513, %v671
        %v673 = vpop.f32.mrf.mxu0
        %674 = vmatprep.mubr.bf16.mxu0 %v502
        %675 = vmatmul.mubr.bf16.gmra.mxu0 %v501
        %v676 = vpop.f32.mrf.mxu0
        %v677 = vadd.f32 %v513, %v676
        %v678 = vpop.f32.mrf.mxu0
        %v679 = vpop.f32.mrf.mxu0
        %v680 = vadd.f32 %v513, %v679
        %v681 = vpop.f32.mrf.mxu0
        %682 = vmatprep.mubr.bf16.mxu0 %v504
        %683 = vmatmul.mubr.bf16.gmra.mxu0 %v503
        %v684 = vpop.f32.mrf.mxu0
        %v685 = vadd.f32 %v513, %v684
        %v686 = vpop.f32.mrf.mxu0
        %v687 = vpop.f32.mrf.mxu0
        %v688 = vadd.f32 %v513, %v687
        %v689 = vpop.f32.mrf.mxu0
        %690 = vmatprep.mubr.bf16.mxu0 %v506
        %691 = vmatmul.mubr.bf16.gmra.mxu0 %v505
        %v692 = vpop.f32.mrf.mxu0
        %v693 = vadd.f32 %v513, %v692
        %v694 = vpop.f32.mrf.mxu0
        %v695 = vpop.f32.mrf.mxu0
        %v696 = vadd.f32 %v513, %v695
        %v697 = vpop.f32.mrf.mxu0
        %698 = vmatprep.mubr.bf16.mxu0 %v508
        %699 = vmatmul.mubr.bf16.gmra.mxu0 %v507
        %v700 = vpop.f32.mrf.mxu0
        %v701 = vadd.f32 %v513, %v700
        %v702 = vpop.f32.mrf.mxu0
        %v703 = vpop.f32.mrf.mxu0
        %v704 = vadd.f32 %v513, %v703
        %v705 = vpop.f32.mrf.mxu0
        %706 = vdwg.mxu0
        %v707 = vmax.f32 %v645, 0.0
        %v708 = vmax.f32 %v648, 0.0
        %v709 = vmax.f32 %v653, 0.0
        %v710 = vmax.f32 %v656, 0.0
        %v711 = vmax.f32 %v661, 0.0
        %v712 = vmax.f32 %v664, 0.0
        %v713 = vmax.f32 %v669, 0.0
        %v714 = vmax.f32 %v672, 0.0
        %v715 = vmax.f32 %v677, 0.0
        %v716 = vmax.f32 %v680, 0.0
        %v717 = vmax.f32 %v685, 0.0
        %v718 = vmax.f32 %v688, 0.0
        %v719 = vmax.f32 %v693, 0.0
        %v720 = vmax.f32 %v696, 0.0
        %v721 = vmax.f32 %v701, 0.0
        %v722 = vmax.f32 %v704, 0.0
        %v723 = vld [vmem:[%s2 + $0x80] sm:$0xf]
        %v724 = vld [vmem:[%s2 + $0x84] sm:$0xf]
        %v725 = vld [vmem:[%s2 + $0x88] sm:$0xf]
        %v726 = vld [vmem:[%s2 + $0x8c] sm:$0xf]
        %v727 = vld [vmem:[%s2 + $0x90] sm:$0xf]
        %v728 = vld [vmem:[%s2 + $0x94] sm:$0xf]
        %v729 = vld [vmem:[%s2 + $0x98] sm:$0xf]
        %v730 = vld [vmem:[%s2 + $0x9c] sm:$0xf]
        %v731 = vld [vmem:[%s2 + $0xa0] sm:$0xf]
        %v732 = vld [vmem:[%s2 + $0xa4] sm:$0xf]
        %v733 = vld [vmem:[%s2 + $0xa8] sm:$0xf]
        %v734 = vld [vmem:[%s2 + $0xac] sm:$0xf]
        %v735 = vld [vmem:[%s2 + $0xb0] sm:$0xf]
        %v736 = vld [vmem:[%s2 + $0xb4] sm:$0xf]
        %v737 = vld [vmem:[%s2 + $0xb8] sm:$0xf]
        %v738 = vld [vmem:[%s2 + $0xbc] sm:$0xf]
        %v739 = vpack.c.bf16 %v708, %v707
        %v740 = vpack.c.bf16 %v710, %v709
        %v741 = vpack.c.bf16 %v712, %v711
        %v742 = vpack.c.bf16 %v714, %v713
        %v743 = vpack.c.bf16 %v716, %v715
        %v744 = vpack.c.bf16 %v718, %v717
        %v745 = vpack.c.bf16 %v720, %v719
        %v746 = vpack.c.bf16 %v722, %v721
        %v747 = vld [vmem:[%s3 + $0x5] sm:$0x1]
        %v748 = vlaneseq
        %v749 = vshrl.u32 %v748, 7
        %v750 = vsub.s32 0, %v749
        %v751 = vrot.slane %v747, %v750
        %v768 = vunpack.c.l.b16 %v723
        %v769 = vunpack.c.l.b16 %v724
        %v770 = vunpack.c.l.b16 %v725
        %v771 = vunpack.c.l.b16 %v726
        %v772 = vunpack.c.l.b16 %v727
        %v773 = vunpack.c.l.b16 %v728
        %v774 = vunpack.c.l.b16 %v729
        %v775 = vunpack.c.l.b16 %v730
        %v776 = vunpack.c.l.b16 %v731
        %v777 = vunpack.c.l.b16 %v732
        %v778 = vunpack.c.l.b16 %v733
        %v779 = vunpack.c.l.b16 %v734
        %v780 = vunpack.c.l.b16 %v735
        %v781 = vunpack.c.l.b16 %v736
        %v782 = vunpack.c.l.b16 %v737
        %v783 = vunpack.c.l.b16 %v738
        %v784 = vpack.c.b16 %v769, %v768
        %v785 = vpack.c.b16 %v771, %v770
        %v786 = vpack.c.b16 %v773, %v772
        %v787 = vpack.c.b16 %v775, %v774
        %v788 = vpack.c.b16 %v777, %v776
        %v789 = vpack.c.b16 %v779, %v778
        %v790 = vpack.c.b16 %v781, %v780
        %v791 = vpack.c.b16 %v783, %v782
        %800 = vmatprep.subr.bf16.mxu0 0
        %801 = vmatpush1.bf16.msra.mxu0 %v791
        %802 = vmatprep.subr.bf16.mxu0 0
        %803 = vmatpush1.bf16.msra.mxu0 %v790
        %804 = vmatprep.subr.bf16.mxu0 0
        %805 = vmatpush1.bf16.msra.mxu0 %v789
        %806 = vmatprep.subr.bf16.mxu0 0
        %807 = vmatpush1.bf16.msra.mxu0 %v788
        %808 = vmatprep.subr.bf16.mxu0 0
        %809 = vmatpush1.bf16.msra.mxu0 %v787
        %810 = vmatprep.subr.bf16.mxu0 0
        %811 = vmatpush1.bf16.msra.mxu0 %v786
        %812 = vmatprep.subr.bf16.mxu0 0
        %813 = vmatpush1.bf16.msra.mxu0 %v785
        %814 = vmatprep.subr.bf16.mxu0 0
        %815 = vmatpush1.bf16.msra.mxu0 %v784
        %816 = vmatprep.subr.bf16.mxu0 0
        %817 = vmatpush2.bf16.msra.mxu0 0
        %818 = vmatprep.subr.bf16.mxu0 0
        %819 = vmatpush2.bf16.msra.mxu0 0
        %820 = vmatprep.subr.bf16.mxu0 0
        %821 = vmatpush2.bf16.msra.mxu0 0
        %822 = vmatprep.subr.bf16.mxu0 0
        %823 = vmatpush2.bf16.msra.mxu0 0
        %824 = vmatprep.subr.bf16.mxu0 0
        %825 = vmatpush2.bf16.msra.mxu0 0
        %826 = vmatprep.subr.bf16.mxu0 0
        %827 = vmatpush2.bf16.msra.mxu0 0
        %828 = vmatprep.subr.bf16.mxu0 0
        %829 = vmatpush2.bf16.msra.mxu0 0
        %830 = vmatprep.subr.bf16.mxu0 0
        %831 = vmatpush2.bf16.msra.mxu0 0
        %832 = vmatprep.mubr.bf16.mxu0 0
        %833 = vmatmul.mubr.bf16.gmra.mxu0 %v739
        %v834 = vpop.f32.mrf.mxu0
        %v835 = vadd.f32 %v751, %v834
        %v836 = vpop.f32.mrf.mxu0
        %v837 = vpop.f32.mrf.mxu0
        %v838 = vadd.f32 %v751, %v837
        %v839 = vpop.f32.mrf.mxu0
        %840 = vmatprep.mubr.bf16.mxu0 0
        %841 = vmatmul.mubr.bf16.gmra.mxu0 %v740
        %v842 = vpop.f32.mrf.mxu0
        %v843 = vadd.f32 %v751, %v842
        %v844 = vpop.f32.mrf.mxu0
        %v845 = vpop.f32.mrf.mxu0
        %v846 = vadd.f32 %v751, %v845
        %v847 = vpop.f32.mrf.mxu0
        %848 = vmatprep.mubr.bf16.mxu0 0
        %849 = vmatmul.mubr.bf16.gmra.mxu0 %v741
        %v850 = vpop.f32.mrf.mxu0
        %v851 = vadd.f32 %v751, %v850
        %v852 = vpop.f32.mrf.mxu0
        %v853 = vpop.f32.mrf.mxu0
        %v854 = vadd.f32 %v751, %v853
        %v855 = vpop.f32.mrf.mxu0
        %856 = vmatprep.mubr.bf16.mxu0 0
        %857 = vmatmul.mubr.bf16.gmra.mxu0 %v742
        %v858 = vpop.f32.mrf.mxu0
        %v859 = vadd.f32 %v751, %v858
        %v860 = vpop.f32.mrf.mxu0
        %v861 = vpop.f32.mrf.mxu0
        %v862 = vadd.f32 %v751, %v861
        %v863 = vpop.f32.mrf.mxu0
        %864 = vmatprep.mubr.bf16.mxu0 0
        %865 = vmatmul.mubr.bf16.gmra.mxu0 %v743
        %v866 = vpop.f32.mrf.mxu0
        %v867 = vadd.f32 %v751, %v866
        %v868 = vpop.f32.mrf.mxu0
        %v869 = vpop.f32.mrf.mxu0
        %v870 = vadd.f32 %v751, %v869
        %v871 = vpop.f32.mrf.mxu0
        %872 = vmatprep.mubr.bf16.mxu0 0
        %873 = vmatmul.mubr.bf16.gmra.mxu0 %v744
        %v874 = vpop.f32.mrf.mxu0
        %v875 = vadd.f32 %v751, %v874
        %v876 = vpop.f32.mrf.mxu0
        %v877 = vpop.f32.mrf.mxu0
        %v878 = vadd.f32 %v751, %v877
        %v879 = vpop.f32.mrf.mxu0
        %880 = vmatprep.mubr.bf16.mxu0 0
        %881 = vmatmul.mubr.bf16.gmra.mxu0 %v745
        %v882 = vpop.f32.mrf.mxu0
        %v883 = vadd.f32 %v751, %v882
        %v884 = vpop.f32.mrf.mxu0
        %v885 = vpop.f32.mrf.mxu0
        %v886 = vadd.f32 %v751, %v885
        %v887 = vpop.f32.mrf.mxu0
        %888 = vmatprep.mubr.bf16.mxu0 0
        %889 = vmatmul.mubr.bf16.gmra.mxu0 %v746
        %v890 = vpop.f32.mrf.mxu0
        %v891 = vadd.f32 %v751, %v890
        %v892 = vpop.f32.mrf.mxu0
        %v893 = vpop.f32.mrf.mxu0
        %v894 = vadd.f32 %v751, %v893
        %v895 = vpop.f32.mrf.mxu0
        %896 = vdwg.mxu0
        %v897 = vmax.f32 %v835, 0.0
        %v898 = vmax.f32 %v838, 0.0
        %v899 = vmax.f32 %v843, 0.0
        %v900 = vmax.f32 %v846, 0.0
        %v901 = vmax.f32 %v851, 0.0
        %v902 = vmax.f32 %v854, 0.0
        %v903 = vmax.f32 %v859, 0.0
        %v904 = vmax.f32 %v862, 0.0
        %v905 = vmax.f32 %v867, 0.0
        %v906 = vmax.f32 %v870, 0.0
        %v907 = vmax.f32 %v875, 0.0
        %v908 = vmax.f32 %v878, 0.0
        %v909 = vmax.f32 %v883, 0.0
        %v910 = vmax.f32 %v886, 0.0
        %v911 = vmax.f32 %v891, 0.0
        %v912 = vmax.f32 %v894, 0.0
        %v913 = vld [vmem:[%s2 + $0xc0] sm:$0xf]
        %v914 = vld [vmem:[%s2 + $0xc4] sm:$0xf]
        %v915 = vpack.c.bf16 %v898, %v897
        %v916 = vpack.c.bf16 %v900, %v899
        %v917 = vpack.c.bf16 %v902, %v901
        %v918 = vpack.c.bf16 %v904, %v903
        %v919 = vpack.c.bf16 %v906, %v905
        %v920 = vpack.c.bf16 %v908, %v907
        %v921 = vpack.c.bf16 %v910, %v909
        %v922 = vpack.c.bf16 %v912, %v911
        %v925 = vunpack.c.l.b16 %v913
        %v926 = vunpack.c.l.b16 %v914
        %v927 = vpack.c.b16 %v926, %v925
        %929 = vmatprep.subr.bf16.mxu0 0
        %930 = vmatpush1.bf16.xpose.msra.mxu0 %v922
        %931 = vmatprep.subr.bf16.mxu0 0
        %932 = vmatpush1.bf16.xpose.msra.mxu0 %v921
        %933 = vmatprep.subr.bf16.mxu0 0
        %934 = vmatpush1.bf16.xpose.msra.mxu0 %v920
        %935 = vmatprep.subr.bf16.mxu0 0
        %936 = vmatpush1.bf16.xpose.msra.mxu0 %v919
        %937 = vmatprep.subr.bf16.mxu0 0
        %938 = vmatpush1.bf16.xpose.msra.mxu0 %v918
        %939 = vmatprep.subr.bf16.mxu0 0
        %940 = vmatpush1.bf16.xpose.msra.mxu0 %v917
        %941 = vmatprep.subr.bf16.mxu0 0
        %942 = vmatpush1.bf16.xpose.msra.mxu0 %v916
        %943 = vmatprep.subr.bf16.mxu0 0
        %944 = vmatpush1.bf16.xpose.msra.mxu0 %v915
        %945 = vmatprep.subr.bf16.mxu0 0
        %946 = vmatpush2.bf16.xpose.msra.mxu0 0
        %947 = vmatprep.subr.bf16.mxu0 0
        %948 = vmatpush2.bf16.xpose.msra.mxu0 0
        %949 = vmatprep.subr.bf16.mxu0 0
        %950 = vmatpush2.bf16.xpose.msra.mxu0 0
        %951 = vmatprep.subr.bf16.mxu0 0
        %952 = vmatpush2.bf16.xpose.msra.mxu0 0
        %953 = vmatprep.subr.bf16.mxu0 0
        %954 = vmatpush2.bf16.xpose.msra.mxu0 0
        %955 = vmatprep.subr.bf16.mxu0 0
        %956 = vmatpush2.bf16.xpose.msra.mxu0 0
        %957 = vmatprep.subr.bf16.mxu0 0
        %958 = vmatpush2.bf16.xpose.msra.mxu0 0
        %959 = vmatprep.subr.bf16.mxu0 0
        %960 = vmatpush2.bf16.xpose.msra.mxu0 0
        %961 = vmatprep.mubr.bf16.mxu0 0
        %962 = vmatmul.mubr.bf16.gmra.mxu0 %v927
        %v963 = vpop.f32.mrf.mxu0
        %v964 = vadd.f32 0.0, %v963
        %v965 = vpop.f32.mrf.mxu0
        %v966 = vpop.f32.mrf.mxu0
        %v967 = vpop.f32.mrf.mxu0
        %968 = vdwg.mxu0
        %v969 = vld [vmem:[%s3 + $0x2] sm:$0x1]
        %971 = vset.pattern.permute.xlu0 0
        %972 = vperm.xlu0 %971, %v969
        %v973 = vpop.permute.xlu0 %972
        %v976 = vunpack.c.l.s4 839922192
        %v977 = vunpack.c.0.s8 %v976
        %v978 = vlaneseq
        %v979 = vshrl.u32 %v978, 7
        %v980 = vsub.s32 %v977, %v979
        %v981 = vrot.slane %v973, %v980
        %v982 = vadd.f32 %v964, %v981
        %983 = vst [vmem:[%s190] sm:$0x1] %v982
        %s984 = sand.u32 %s115, 1
        %s985 = scalar_lea.sflag [#allocation3], %s984
        %s986 = sand.u32 %s115, 1
        %s987 = scalar_lea.vmem [#allocation2], %s986
        // Predicated region
        $region37: #{critic_forward.1} parent=35 // pred_check
          %p988 = pneg %p125
        $region38: #{critic_forward.1} parent=35 // pred_check_branch
          %990 = sbr.rel (%p988) target = $region40
        $region39: #{critic_forward.1} parent=35 // pred_region
          %s992 = ssub.s32 16, 16
          %993 = vsyncadd %s985, %s992
          %s994 = smul.addr %s18, 16
          %s995 = scalar_lea.hbm %s4, %s994
          %s997 = sshll.u32 %s987, 4
          %s998 = int_to_ptr.vmem [resolvable:$true] %s997
          %1000 = dma.vmem_to_hbm [thread:$0]  %s998, 16, %s995, %s985
        $region40: #{critic_forward.1} parent=35 // pred_fallthru
          _
      $region36: #{critic_forward.1} parent=5 // pred_fallthru
        _
      %p1001 = scmp.le.s32.totalorder 2, %s13
      // Predicated region
      $region41: #{critic_forward.1} parent=5 // pred_check
        %p1002 = pneg %p1001
      $region42: #{critic_forward.1} parent=5 // pred_check_branch
        %1004 = sbr.rel (%p1002) target = $region44
      $region43: #{critic_forward.1} parent=5 // pred_region
        %s1005 = ssub.s32 %s13, 2
        // Predicated region
        $region45: #{critic_forward.1} parent=43 // pred_check
          %p1006 = pneg %p131
        $region46: #{critic_forward.1} parent=43 // pred_check_branch
          %1008 = sbr.rel (%p1006) target = $region48
        $region47: #{critic_forward.1} parent=43 // pred_region
          %s1009 = sand.u32 %s116, 1
          %s1010 = scalar_lea.sflag [#allocation3], %s1009
          %s1011 = sand.u32 %s116, 1
          %s1012 = scalar_lea.vmem [#allocation2], %s1011
          %1013 = dma.done %s1010, 16
        $region48: #{critic_forward.1} parent=43 // pred_fallthru
          _
      $region44: #{critic_forward.1} parent=5 // pred_fallthru
        _
    $region6: #{critic_forward.1} parent=1 // loop_footer
      %s17 = sadd.s32 1, %s13
    $region7: #{critic_forward.1} parent=1 // loop_footer_branch
      %12 = sbr.rel target = $region3
    $region8: #{critic_forward.1} parent=1 // loop_exit
      _
    %1014 = vsyncpa [#allocation3], 1
    %s1015 = scalar_lea.sflag [#allocation3], 1
    %1016 = vsyncpa %s1015, 1

</llo_original>
